<compile_context>
chip_gen: v7x
topology: tpu7x:2x2x1
jax: 0.10.0
libtpu: 0.0.40
codegen_flags: <defaults>
</compile_context>

<pallas_src>
import jax
import jax.numpy as jnp
from jax.experimental import pallas as pl
from jax.experimental.pallas import tpu as pltpu


def _round_up(x, m):
    return ((x + m - 1) // m) * m


def _lif_dense_seq_kernel(x_ref, w_ref, b_ref, alpha_ref, vth_ref,
                          mem0_ref, spk0_ref,
                          mem_out_ref, spk_out_ref,
                          acc_ref, mem_s, spk_s):
    """Grid = (Bi, Oj, T, Kk).  State for the (Bi, Oj) tile is carried in VMEM
    scratch across the T axis; d_input accumulates over K in f32."""
    t = pl.program_id(2)
    k = pl.program_id(3)
    nk = pl.num_programs(3)

    # Load the initial neuron state once per (Bi, Oj) tile.
    @pl.when((t == 0) & (k == 0))
    def _():
        mem_s[...] = mem0_ref[...]
        spk_s[...] = spk0_ref[...]

    # Zero the dense accumulator at the start of each K reduction.
    @pl.when(k == 0)
    def _():
        acc_ref[...] = jnp.zeros_like(acc_ref)

    # MXU: bf16 x bf16 -> f32 accumulation.
    acc_ref[...] += jnp.dot(x_ref[...], w_ref[...],
                            preferred_element_type=jnp.float32)

    # After the last K block: LIF hard-reset update (all f32 on the VPU).
    @pl.when(k == nk - 1)
    def _():
        d_input = acc_ref[...] + b_ref[...]                 # (tm, tn)
        alpha = alpha_ref[...]                              # (1, tn) broadcast
        mem_new = mem_s[...] * alpha * (1.0 - spk_s[...]) + (1.0 - alpha) * d_input
        spk_new = (mem_new - vth_ref[...] > 0.0).astype(jnp.float32)
        mem_s[...] = mem_new
        spk_s[...] = spk_new
        mem_out_ref[...] = mem_new
        spk_out_ref[...] = spk_new


def spike_dense_hardreset_forward(input_spikes, weight, bias, tau_m,
                                  mem0, spike0, vth,
                                  *, tm=256, tn=512, tk=512,
                                  vmem_limit_bytes=None):
    """Fused T-step forward of spike_dense_test_origin_hardreset.

    Returns (mem_seq, spike_seq), each (T, B, output_dim) float32 — the
    per-timestep (self.mem, self.spike) the torch module would return when
    its forward() is called once per timestep.
    """
    T, B, I = input_spikes.shape
    O = weight.shape[1]
    f32 = jnp.float32

    # Lane/sublane-dense padding: B -> multiple of 8, I/O -> multiples of 128.
    B_pad = _round_up(B, 8)
    I_pad = _round_up(I, 128)
    O_pad = _round_up(O, 128)
    tm = min(tm, B_pad)
    tn = min(tn, O_pad)
    tk = min(tk, I_pad)
    B_pad = _round_up(B_pad, tm)
    I_pad = _round_up(I_pad, tk)
    O_pad = _round_up(O_pad, tn)

    # Padded / dtype-converted operands (zeros in the pad region).
    x_p = jnp.zeros((T, B_pad, I_pad), jnp.bfloat16)
    x_p = x_p.at[:, :B, :I].set(input_spikes.astype(jnp.bfloat16))
    w_p = jnp.zeros((I_pad, O_pad), jnp.bfloat16)
    w_p = w_p.at[:I, :O].set(weight.astype(jnp.bfloat16))
    b_p = jnp.zeros((1, O_pad), f32).at[0, :O].set(bias.astype(f32))
    alpha = jax.nn.sigmoid(tau_m.astype(f32))       # parameter: constant over time loop
    a_p = jnp.zeros((1, O_pad), f32).at[0, :O].set(alpha)
    vth_p = jnp.full((1, O_pad), vth, f32)          # (1, O) broadcast, not (B, O)
    mem_p = jnp.zeros((B_pad, O_pad), f32).at[:B, :O].set(mem0.astype(f32))
    spk_p = jnp.zeros((B_pad, O_pad), f32).at[:B, :O].set(spike0.astype(f32))

    grid = (B_pad // tm, O_pad // tn, T, I_pad // tk)

    mem_seq, spk_seq = pl.pallas_call(
        _lif_dense_seq_kernel,
        out_shape=(jax.ShapeDtypeStruct((T, B_pad, O_pad), f32),
                   jax.ShapeDtypeStruct((T, B_pad, O_pad), f32)),
        grid=grid,
        in_specs=[
            pl.BlockSpec((None, tm, tk), lambda i, j, t, k: (t, i, k)),   # input spikes [t]
            pl.BlockSpec((tk, tn), lambda i, j, t, k: (k, j)),            # weight
            pl.BlockSpec((1, tn), lambda i, j, t, k: (0, j)),             # bias
            pl.BlockSpec((1, tn), lambda i, j, t, k: (0, j)),             # alpha = sigmoid(tau_m)
            pl.BlockSpec((1, tn), lambda i, j, t, k: (0, j)),             # v_th
            pl.BlockSpec((tm, tn), lambda i, j, t, k: (i, j)),            # mem0
            pl.BlockSpec((tm, tn), lambda i, j, t, k: (i, j)),            # spike0
        ],
        out_specs=(
            pl.BlockSpec((None, tm, tn), lambda i, j, t, k: (t, i, j)),   # mem per step
            pl.BlockSpec((None, tm, tn), lambda i, j, t, k: (t, i, j)),   # spike per step
        ),
        scratch_shapes=[
            pltpu.VMEM((tm, tn), f32),   # d_input accumulator
            pltpu.VMEM((tm, tn), f32),   # membrane state (carried across T)
            pltpu.VMEM((tm, tn), f32),   # spike state    (carried across T)
        ],
        compiler_params=pltpu.CompilerParams(
            dimension_semantics=("parallel", "parallel", "arbitrary", "arbitrary"),
            vmem_limit_bytes=vmem_limit_bytes,
        ),
    )(x_p, w_p, b_p, a_p, vth_p, mem_p, spk_p)

    return mem_seq[:, :B, :O], spk_seq[:, :B, :O]


if __name__ == "__main__":
    key = jax.random.PRNGKey(0)
    T, B, input_dim, output_dim = 8, 2, 32, 32
    vth = 0.5

    k = jax.random.split(key, 6)
    # nn.Linear default init: U(-1/sqrt(in), 1/sqrt(in)) for weight and bias.
    bound = 1.0 / jnp.sqrt(jnp.float32(input_dim))
    weight = jax.random.uniform(k[0], (input_dim, output_dim),
                                minval=-bound, maxval=bound, dtype=jnp.float32)
    bias = jax.random.uniform(k[1], (output_dim,),
                              minval=-bound, maxval=bound, dtype=jnp.float32)
    # tau_m ~ U(low_m=0, high_m=4)
    tau_m = jax.random.uniform(k[2], (output_dim,),
                               minval=0.0, maxval=4.0, dtype=jnp.float32)
    # set_neuron_state: mem, spike ~ U(0,1); v_th = vth (constant)
    mem0 = jax.random.uniform(k[3], (B, output_dim), dtype=jnp.float32)
    spike0 = jax.random.uniform(k[4], (B, output_dim), dtype=jnp.float32)
    # input spike train
    input_spikes = (jax.random.uniform(k[5], (T, B, input_dim)) > 0.5).astype(jnp.float32)

    mem_seq, spk_seq = spike_dense_hardreset_forward(
        input_spikes, weight, bias, tau_m, mem0, spike0, vth)
    jax.block_until_ready((mem_seq, spk_seq))

    # Reference: plain-JAX per-timestep loop (same bf16 matmul operands, f32 state).
    x_bf = input_spikes.astype(jnp.bfloat16)
    w_bf = weight.astype(jnp.bfloat16)
    alpha = jax.nn.sigmoid(tau_m)
    mem_r, spk_r = mem0, spike0
    mem_list, spk_list = [], []
    for t in range(T):
        d = jnp.dot(x_bf[t], w_bf, preferred_element_type=jnp.float32) + bias
        mem_r = mem_r * alpha * (1.0 - spk_r) + (1.0 - alpha) * d
        spk_r = (mem_r - vth > 0.0).astype(jnp.float32)
        mem_list.append(mem_r)
        spk_list.append(spk_r)
    mem_ref = jnp.stack(mem_list)
    spk_ref = jnp.stack(spk_list)

    assert jnp.allclose(mem_seq, mem_ref, atol=1e-4), "mem mismatch"
    assert jnp.array_equal(spk_seq, spk_ref), "spike mismatch"

    print("KERNEL_OK")
</pallas_src>

<mosaic_0001>
module attributes {stable_mosaic.version = 11 : i64} {
  func.func @_lif_dense_seq_kernel(%arg0: i32, %arg1: i32, %arg2: i32, %arg3: i32, %arg4: memref<1x8x128xbf16, #tpu.memory_space<vmem>>, %arg5: memref<128x128xbf16, #tpu.memory_space<vmem>>, %arg6: memref<1x128xf32, #tpu.memory_space<vmem>>, %arg7: memref<1x128xf32, #tpu.memory_space<vmem>>, %arg8: memref<1x128xf32, #tpu.memory_space<vmem>>, %arg9: memref<8x128xf32, #tpu.memory_space<vmem>>, %arg10: memref<8x128xf32, #tpu.memory_space<vmem>>, %arg11: memref<1x8x128xf32, #tpu.memory_space<vmem>>, %arg12: memref<1x8x128xf32, #tpu.memory_space<vmem>>, %arg13: memref<8x128xf32, #tpu.memory_space<vmem>>, %arg14: memref<8x128xf32, #tpu.memory_space<vmem>>, %arg15: memref<8x128xf32, #tpu.memory_space<vmem>>) attributes {dimension_semantics = [#tpu.dimension_semantics<parallel>, #tpu.dimension_semantics<parallel>, #tpu.dimension_semantics<arbitrary>, #tpu.dimension_semantics<arbitrary>], iteration_bounds = array<i64: 1, 1, 8, 1>, scalar_prefetch = 0 : i64, scratch_operands = 3 : i64, tpu.core_type = #tpu.core_type<tc>, window_params = [{transform_indices = @transform_0, window_bounds = array<i64: 1, 8, 128>}, {transform_indices = @transform_1, window_bounds = array<i64: 128, 128>}, {transform_indices = @transform_2, window_bounds = array<i64: 1, 128>}, {transform_indices = @transform_3, window_bounds = array<i64: 1, 128>}, {transform_indices = @transform_4, window_bounds = array<i64: 1, 128>}, {transform_indices = @transform_5, window_bounds = array<i64: 8, 128>}, {transform_indices = @transform_6, window_bounds = array<i64: 8, 128>}, {transform_indices = @transform_7, window_bounds = array<i64: 1, 8, 128>}, {transform_indices = @transform_8, window_bounds = array<i64: 1, 8, 128>}]} {
    %c0_i32 = arith.constant 0 : i32
    %0 = arith.cmpi eq, %arg2, %c0_i32 : i32
    %c0_i32_0 = arith.constant 0 : i32
    %1 = arith.cmpi eq, %arg3, %c0_i32_0 : i32
    %2 = arith.andi %0, %1 : i1
    %3 = arith.extui %2 : i1 to i32
    %c0_i32_1 = arith.constant 0 : i32
    %4 = arith.cmpi ne, %3, %c0_i32_1 : i32
    scf.if %4 {
      %c0_14 = arith.constant 0 : index
      %c0_15 = arith.constant 0 : index
      %18 = vector.load %arg9[%c0_14, %c0_15] : memref<8x128xf32, #tpu.memory_space<vmem>>, vector<8x128xf32>
      %c0_16 = arith.constant 0 : index
      %c0_17 = arith.constant 0 : index
      %19 = vector.load %arg14[%c0_16, %c0_17] : memref<8x128xf32, #tpu.memory_space<vmem>>, vector<8x128xf32>
      tpu.vector_store %arg14[%c0_16, %c0_17], %18 {strides = array<i32>} : memref<8x128xf32, #tpu.memory_space<vmem>>, vector<8x128xf32>,
      %c0_18 = arith.constant 0 : index
      %c0_19 = arith.constant 0 : index
      %20 = vector.load %arg10[%c0_18, %c0_19] : memref<8x128xf32, #tpu.memory_space<vmem>>, vector<8x128xf32>
      %c0_20 = arith.constant 0 : index
      %c0_21 = arith.constant 0 : index
      %21 = vector.load %arg15[%c0_20, %c0_21] : memref<8x128xf32, #tpu.memory_space<vmem>>, vector<8x128xf32>
      tpu.vector_store %arg15[%c0_20, %c0_21], %20 {strides = array<i32>} : memref<8x128xf32, #tpu.memory_space<vmem>>, vector<8x128xf32>,
    } else {
    }
    %c0_i32_2 = arith.constant 0 : i32
    %5 = arith.cmpi eq, %arg3, %c0_i32_2 : i32
    %6 = arith.extui %5 : i1 to i32
    %c0_i32_3 = arith.constant 0 : i32
    %7 = arith.cmpi ne, %6, %c0_i32_3 : i32
    scf.if %7 {
      %cst_14 = arith.constant 0.000000e+00 : f32
      %18 = vector.broadcast %cst_14 : f32 to vector<8x128xf32>
      %c0_15 = arith.constant 0 : index
      %c0_16 = arith.constant 0 : index
      %19 = vector.load %arg13[%c0_15, %c0_16] : memref<8x128xf32, #tpu.memory_space<vmem>>, vector<8x128xf32>
      tpu.vector_store %arg13[%c0_15, %c0_16], %18 {strides = array<i32>} : memref<8x128xf32, #tpu.memory_space<vmem>>, vector<8x128xf32>,
    } else {
    }
    %c0 = arith.constant 0 : index
    %c0_4 = arith.constant 0 : index
    %8 = vector.load %arg13[%c0, %c0_4] : memref<8x128xf32, #tpu.memory_space<vmem>>, vector<8x128xf32>
    %c0_5 = arith.constant 0 : index
    %c0_6 = arith.constant 0 : index
    %c0_7 = arith.constant 0 : index
    %9 = vector.load %arg4[%c0_5, %c0_6, %c0_7] : memref<1x8x128xbf16, #tpu.memory_space<vmem>>, vector<1x8x128xbf16>
    %10 = vector.shape_cast %9 : vector<1x8x128xbf16> to vector<8x128xbf16>
    %c0_8 = arith.constant 0 : index
    %c0_9 = arith.constant 0 : index
    %11 = vector.load %arg5[%c0_8, %c0_9] : memref<128x128xbf16, #tpu.memory_space<vmem>>, vector<128x128xbf16>
    %cst = arith.constant dense<0.000000e+00> : vector<8x128xf32>
    %12 = tpu.matmul %10, %11, %cst {dimension_numbers = #tpu.dot_dimension_numbers<[1], [0], [0], [1], [0, 0, 1, 1], [], []>} : vector<8x128xbf16>, vector<128x128xbf16>, vector<8x128xf32> -> vector<8x128xf32>
    %13 = arith.addf %8, %12 : vector<8x128xf32>
    %c0_10 = arith.constant 0 : index
    %c0_11 = arith.constant 0 : index
    %14 = vector.load %arg13[%c0_10, %c0_11] : memref<8x128xf32, #tpu.memory_space<vmem>>, vector<8x128xf32>
    tpu.vector_store %arg13[%c0_10, %c0_11], %13 {strides = array<i32>} : memref<8x128xf32, #tpu.memory_space<vmem>>, vector<8x128xf32>,
    %c0_i32_12 = arith.constant 0 : i32
    %15 = arith.cmpi eq, %arg3, %c0_i32_12 : i32
    %16 = arith.extui %15 : i1 to i32
    %c0_i32_13 = arith.constant 0 : i32
    %17 = arith.cmpi ne, %16, %c0_i32_13 : i32
    scf.if %17 {
      %c0_14 = arith.constant 0 : index
      %c0_15 = arith.constant 0 : index
      %18 = vector.load %arg13[%c0_14, %c0_15] : memref<8x128xf32, #tpu.memory_space<vmem>>, vector<8x128xf32>
      %c0_16 = arith.constant 0 : index
      %c0_17 = arith.constant 0 : index
      %19 = vector.load %arg6[%c0_16, %c0_17] : memref<1x128xf32, #tpu.memory_space<vmem>>, vector<1x128xf32>
      %20 = vector.broadcast %19 : vector<1x128xf32> to vector<8x128xf32>
      %21 = arith.addf %18, %20 : vector<8x128xf32>
      %c0_18 = arith.constant 0 : index
      %c0_19 = arith.constant 0 : index
      %22 = vector.load %arg7[%c0_18, %c0_19] : memref<1x128xf32, #tpu.memory_space<vmem>>, vector<1x128xf32>
      %c0_20 = arith.constant 0 : index
      %c0_21 = arith.constant 0 : index
      %23 = vector.load %arg14[%c0_20, %c0_21] : memref<8x128xf32, #tpu.memory_space<vmem>>, vector<8x128xf32>
      %24 = vector.broadcast %22 : vector<1x128xf32> to vector<8x128xf32>
      %25 = arith.mulf %23, %24 : vector<8x128xf32>
      %c0_22 = arith.constant 0 : index
      %c0_23 = arith.constant 0 : index
      %26 = vector.load %arg15[%c0_22, %c0_23] : memref<8x128xf32, #tpu.memory_space<vmem>>, vector<8x128xf32>
      %cst_24 = arith.constant 1.000000e+00 : f32
      %27 = vector.broadcast %cst_24 : f32 to vector<8x128xf32>
      %28 = arith.subf %27, %26 : vector<8x128xf32>
      %29 = arith.mulf %25, %28 : vector<8x128xf32>
      %cst_25 = arith.constant 1.000000e+00 : f32
      %30 = vector.broadcast %cst_25 : f32 to vector<1x128xf32>
      %31 = arith.subf %30, %22 : vector<1x128xf32>
      %32 = vector.broadcast %31 : vector<1x128xf32> to vector<8x128xf32>
      %33 = arith.mulf %32, %21 : vector<8x128xf32>
      %34 = arith.addf %29, %33 : vector<8x128xf32>
      %c0_26 = arith.constant 0 : index
      %c0_27 = arith.constant 0 : index
      %35 = vector.load %arg8[%c0_26, %c0_27] : memref<1x128xf32, #tpu.memory_space<vmem>>, vector<1x128xf32>
      %36 = vector.broadcast %35 : vector<1x128xf32> to vector<8x128xf32>
      %37 = arith.subf %34, %36 : vector<8x128xf32>
      %cst_28 = arith.constant 0.000000e+00 : f32
      %38 = vector.broadcast %cst_28 : f32 to vector<8x128xf32>
      %39 = arith.cmpf ogt, %37, %38 : vector<8x128xf32>
      %40 = arith.extui %39 : vector<8x128xi1> to vector<8x128xi32>
      %41 = arith.sitofp %40 : vector<8x128xi32> to vector<8x128xf32>
      %c0_29 = arith.constant 0 : index
      %c0_30 = arith.constant 0 : index
      %42 = vector.load %arg14[%c0_29, %c0_30] : memref<8x128xf32, #tpu.memory_space<vmem>>, vector<8x128xf32>
      tpu.vector_store %arg14[%c0_29, %c0_30], %34 {strides = array<i32>} : memref<8x128xf32, #tpu.memory_space<vmem>>, vector<8x128xf32>,
      %c0_31 = arith.constant 0 : index
      %c0_32 = arith.constant 0 : index
      %43 = vector.load %arg15[%c0_31, %c0_32] : memref<8x128xf32, #tpu.memory_space<vmem>>, vector<8x128xf32>
      tpu.vector_store %arg15[%c0_31, %c0_32], %41 {strides = array<i32>} : memref<8x128xf32, #tpu.memory_space<vmem>>, vector<8x128xf32>,
      %c0_33 = arith.constant 0 : index
      %c0_34 = arith.constant 0 : index
      %c0_35 = arith.constant 0 : index
      %44 = vector.load %arg11[%c0_33, %c0_34, %c0_35] : memref<1x8x128xf32, #tpu.memory_space<vmem>>, vector<1x8x128xf32>
      %45 = vector.shape_cast %44 : vector<1x8x128xf32> to vector<8x128xf32>
      %46 = vector.shape_cast %34 : vector<8x128xf32> to vector<1x8x128xf32>
      tpu.vector_store %arg11[%c0_33, %c0_34, %c0_35], %46 {strides = array<i32>} : memref<1x8x128xf32, #tpu.memory_space<vmem>>, vector<1x8x128xf32>,
      %c0_36 = arith.constant 0 : index
      %c0_37 = arith.constant 0 : index
      %c0_38 = arith.constant 0 : index
      %47 = vector.load %arg12[%c0_36, %c0_37, %c0_38] : memref<1x8x128xf32, #tpu.memory_space<vmem>>, vector<1x8x128xf32>
      %48 = vector.shape_cast %47 : vector<1x8x128xf32> to vector<8x128xf32>
      %49 = vector.shape_cast %41 : vector<8x128xf32> to vector<1x8x128xf32>
      tpu.vector_store %arg12[%c0_36, %c0_37, %c0_38], %49 {strides = array<i32>} : memref<1x8x128xf32, #tpu.memory_space<vmem>>, vector<1x8x128xf32>,
    } else {
    }
    return
  }
  func.func @transform_0(%arg0: i32, %arg1: i32, %arg2: i32, %arg3: i32) -> (i32, i32, i32) {
    %c0_i32 = arith.constant 0 : i32
    return %arg2, %arg0, %arg3 : i32, i32, i32
  }
  func.func @transform_1(%arg0: i32, %arg1: i32, %arg2: i32, %arg3: i32) -> (i32, i32) {
    %c0_i32 = arith.constant 0 : i32
    return %arg3, %arg1 : i32, i32
  }
  func.func @transform_2(%arg0: i32, %arg1: i32, %arg2: i32, %arg3: i32) -> (i32, i32) {
    %c0_i32 = arith.constant 0 : i32
    %c0_i32_0 = arith.constant 0 : i32
    return %c0_i32, %arg1 : i32, i32
  }
  func.func @transform_3(%arg0: i32, %arg1: i32, %arg2: i32, %arg3: i32) -> (i32, i32) {
    %c0_i32 = arith.constant 0 : i32
    %c0_i32_0 = arith.constant 0 : i32
    return %c0_i32, %arg1 : i32, i32
  }
  func.func @transform_4(%arg0: i32, %arg1: i32, %arg2: i32, %arg3: i32) -> (i32, i32) {
    %c0_i32 = arith.constant 0 : i32
    %c0_i32_0 = arith.constant 0 : i32
    return %c0_i32, %arg1 : i32, i32
  }
  func.func @transform_5(%arg0: i32, %arg1: i32, %arg2: i32, %arg3: i32) -> (i32, i32) {
    %c0_i32 = arith.constant 0 : i32
    return %arg0, %arg1 : i32, i32
  }
  func.func @transform_6(%arg0: i32, %arg1: i32, %arg2: i32, %arg3: i32) -> (i32, i32) {
    %c0_i32 = arith.constant 0 : i32
    return %arg0, %arg1 : i32, i32
  }
  func.func @transform_7(%arg0: i32, %arg1: i32, %arg2: i32, %arg3: i32) -> (i32, i32, i32) {
    %c0_i32 = arith.constant 0 : i32
    return %arg2, %arg0, %arg1 : i32, i32, i32
  }
  func.func @transform_8(%arg0: i32, %arg1: i32, %arg2: i32, %arg3: i32) -> (i32, i32, i32) {
    %c0_i32 = arith.constant 0 : i32
    return %arg2, %arg0, %arg1 : i32, i32, i32
  }
}

</mosaic_0001>

<llo_original>
// kernel: tpu_custom_call.1
$region0: #{tpu_custom_call.1}
  #allocation0 [shape = 'u32[]', space=smem, size = 0x4, offset = 0x4, fixed_abs, tag = 'smem constant byte address 0x4 - core index']
  #allocation1 [shape = 'u32[144,128]{1,0:T(1,128)}', space=vmem, size = 0x12000, scoped, tag = 'internal scratch']
  #allocation2 [shape = 'f32[8,128]{1,0:T(8,128)}', space=vmem, size = 0x1000, scoped, tag = 'scratch operand']
  #allocation3 [shape = 'f32[8,128]{1,0:T(8,128)}', space=vmem, size = 0x1000, scoped, tag = 'scratch operand']
  #allocation4 [shape = 'f32[8,128]{1,0:T(8,128)}', space=vmem, size = 0x1000, scoped, tag = 'scratch operand']
  %s0 = inlined_call_operand.hbm [shape: bf16[8,8,128], index: 0, kind: input, shape index: {}]
  %s1 = inlined_call_operand.hbm [shape: bf16[128,128], index: 1, kind: input, shape index: {}]
  %s2 = inlined_call_operand.vmem [shape: f32[1,128], index: 2, kind: input, shape index: {}]
  %s3 = inlined_call_operand.vmem [shape: f32[1,128], index: 3, kind: input, shape index: {}]
  %s4 = inlined_call_operand.hbm [shape: f32[1,128], index: 4, kind: input, shape index: {}]
  %s5 = inlined_call_operand.vmem [shape: f32[8,128], index: 5, kind: input, shape index: {}]
  %s6 = inlined_call_operand.vmem [shape: f32[8,128], index: 6, kind: input, shape index: {}]
  %s7 = inlined_call_operand.hbm [shape: f32[8,8,128], index: 7, kind: output, shape index: {0}]
  %s8 = inlined_call_operand.hbm [shape: f32[8,8,128], index: 8, kind: output, shape index: {1}]
  %9 = xla_tuple %s7, %s8
  %s10 = sld [smem:[#allocation0]]
  $region93: #{tpu_custom_call.1} parent=0
    _
  %s12 = ssub.s32 1, %s10
  %s13 = scalar_select 0, %s12, %s10
  $region1: #{tpu_custom_call.1} parent=0
    #allocation5 [shape = 'u8[4096]{0}', space=vmem, size = 0x1000, scoped, tag = 'input window, operand 0']
    #allocation6 [shape = 's32[2]{0}', space=sflag, size = 0x8, scoped, tag = 'scoped memory for tpu_custom_call.1']
    #allocation7 [shape = 's32[2]{0}', space=sflag, size = 0x8, scoped, tag = 'scoped memory for tpu_custom_call.1']
    #allocation8 [shape = 'u8[32768]{0}', space=vmem, size = 0x8000, scoped, tag = 'input window, operand 1, single buffered']
    #allocation9 [shape = 's32[1]{0}', space=sflag, size = 0x4, scoped, tag = 'scoped memory for tpu_custom_call.1']
    #allocation10 [shape = 'u8[512]{0}', space=vmem, size = 0x400, scoped, tag = 'input window, operand 4, single buffered']
    #allocation11 [shape = 'u8[8192]{0}', space=vmem, size = 0x2000, scoped, tag = 'output window, operand 0']
    #allocation12 [shape = 'u8[8192]{0}', space=vmem, size = 0x2000, scoped, tag = 'output window, operand 1']
    #allocation13 [shape = 's32[2]{0}', space=sflag, size = 0x8, scoped, tag = 'scoped memory for tpu_custom_call.1']
    %14 = vsyncpa [#allocation6], 0
    %s15 = scalar_lea.sflag [#allocation6], 1
    %16 = vsyncpa %s15, 0
    %17 = vsyncpa [#allocation9], 0
    %18 = vsyncpa [#allocation7], 0
    %s19 = scalar_lea.sflag [#allocation7], 1
    %20 = vsyncpa %s19, 0
    %21 = vsyncpa [#allocation13], 0
    %s22 = scalar_lea.sflag [#allocation13], 1
    %23 = vsyncpa %s22, 0
    loop: start=0, step=1, limit=10
    $region2: #{tpu_custom_call.1} parent=1 // loop_pre_header
      _
    $region3: #{tpu_custom_call.1} parent=1 // loop_header
      %s25 = sphi 0, %s29
      %p26 = scmp.ge.s32.totalorder %s25, 10
      %s32 = sphi 0, %s58
      %s33 = sphi 0, %s54
      %s34 = sphi 0, %s50
      %s35 = sphi 0, %s46
      %s36 = sphi 0, %s32
      %s37 = sphi 0, %s33
      %s38 = sphi 0, %s34
      %s39 = sphi 0, %s35
      %s40 = sphi 0, %s36
      %s41 = sphi 0, %s37
      %s42 = sphi 0, %s38
      %s43 = sphi 0, %s39
      %s65 = sphi 0, %s67
      %s68 = sphi 0, %s65
      %s69 = sphi 0, %s68
      %s85 = sphi 0, %s69
      %s93 = sphi 0, %s95
      %s96 = sphi 0, %s93
      %s97 = sphi 0, %s96
      %s113 = sphi 0, %s97
      %s119 = sphi 0, %s121
      %s122 = sphi 0, %s119
      %s123 = sphi 0, %s122
      %s139 = sphi 0, %s123
      %s145 = sphi 0, %s147
      %s148 = sphi 0, %s145
      %s149 = sphi 0, %s148
      %s165 = sphi 0, %s149
      %s171 = sphi 0, %s173
      %s174 = sphi 0, %s171
      %s175 = sphi 0, %s174
      %s191 = sphi 0, %s175
      %s199 = sphi 0, %s201
      %s202 = sphi 0, %s199
      %s203 = sphi 0, %s202
      %s219 = sphi 0, %s203
      %s227 = sphi 0, %s229
      %s230 = sphi 0, %s227
      %s231 = sphi 0, %s230
      %s247 = sphi 0, %s231
      %s257 = sphi 0, %s259
      %s260 = sphi 0, %s257
      %s261 = sphi 0, %s260
      %s277 = sphi 0, %s261
      %s287 = sphi 0, %s289
      %s290 = sphi 0, %s287
      %s291 = sphi 0, %s290
      %s307 = sphi 0, %s291
    $region4: #{tpu_custom_call.1} parent=1 // loop_header_branch
      %28 = sbr.rel (%p26) target = $region8
    $region5: #{tpu_custom_call.1} parent=1 // loop_body
      %s30 = ssub.s32 %s25, 1
      %s31 = ssub.s32 %s25, 2
      %s44 = sadd.s32 1, %s35
      %p45 = scmp.ge.s32.totalorder %s44, 1
      %s46 = scalar_select %p45, 0, %s44
      %s47 = sadd.s32 1, %s34
      %s48 = scalar_select %p45, %s47, %s34
      %p49 = scmp.ge.s32.totalorder %s48, 8
      %s50 = scalar_select %p49, 0, %s48
      %s51 = sadd.s32 1, %s33
      %s52 = scalar_select %p49, %s51, %s33
      %p53 = scmp.ge.s32.totalorder %s52, 1
      %s54 = scalar_select %p53, 0, %s52
      %s55 = sadd.s32 1, %s32
      %s56 = scalar_select %p53, %s55, %s32
      %p57 = scmp.ge.s32.totalorder %s56, 1
      %s58 = scalar_select %p57, 0, %s56
      %s59 = ssub.s32 %s34, %s50
      %s60 = ssub.s32 %s32, %s58
      %s61 = sor.u32 %s59, %s60
      %s62 = ssub.s32 %s35, %s46
      %s63 = sor.u32 %s61, %s62
      %p64 = scmp.eq.s32.totalorder %s63, 0
      %s66 = sadd.s32 %s65, 1
      %s67 = scalar_select %p64, %s65, %s66
      %p70 = pneg %p64
      %p71 = scmp.eq.s32.totalorder %s25, 7
      %p72 = por %p70, %p71
      %p73 = scmp.ne.s32.totalorder %s65, %s68
      %p74 = scmp.eq.s32.totalorder %s25, 0
      %p75 = por %p73, %p74
      %p76 = scmp.ne.s32.totalorder %s65, %s68
      %p77 = scmp.eq.s32.totalorder %s30, 7
      %p78 = por %p76, %p77
      %p79 = scmp.ne.s32.totalorder %s68, %s69
      %p80 = scmp.eq.s32.totalorder %s30, 0
      %p81 = por %p79, %p80
      %p82 = scmp.ne.s32.totalorder %s68, %s69
      %p83 = scmp.eq.s32.totalorder %s31, 7
      %p84 = por %p82, %p83
      %p86 = scmp.ne.s32.totalorder %s69, %s85
      %p87 = scmp.eq.s32.totalorder %s31, 0
      %p88 = por %p86, %p87
      %s89 = ssub.s32 %s35, %s46
      %s90 = ssub.s32 %s33, %s54
      %s91 = sor.u32 %s89, %s90
      %p92 = scmp.eq.s32.totalorder %s91, 0
      %s94 = sadd.s32 %s93, 1
      %s95 = scalar_select %p92, %s93, %s94
      %p98 = pneg %p92
      %p99 = scmp.eq.s32.totalorder %s25, 7
      %p100 = por %p98, %p99
      %p101 = scmp.ne.s32.totalorder %s93, %s96
      %p102 = scmp.eq.s32.totalorder %s25, 0
      %p103 = por %p101, %p102
      %p104 = scmp.ne.s32.totalorder %s93, %s96
      %p105 = scmp.eq.s32.totalorder %s30, 7
      %p106 = por %p104, %p105
      %p107 = scmp.ne.s32.totalorder %s96, %s97
      %p108 = scmp.eq.s32.totalorder %s30, 0
      %p109 = por %p107, %p108
      %p110 = scmp.ne.s32.totalorder %s96, %s97
      %p111 = scmp.eq.s32.totalorder %s31, 7
      %p112 = por %p110, %p111
      %p114 = scmp.ne.s32.totalorder %s97, %s113
      %p115 = scmp.eq.s32.totalorder %s31, 0
      %p116 = por %p114, %p115
      %s117 = ssub.s32 %s33, %s54
      %p118 = scmp.eq.s32.totalorder %s117, 0
      %s120 = sadd.s32 %s119, 1
      %s121 = scalar_select %p118, %s119, %s120
      %p124 = pneg %p118
      %p125 = scmp.eq.s32.totalorder %s25, 7
      %p126 = por %p124, %p125
      %p127 = scmp.ne.s32.totalorder %s119, %s122
      %p128 = scmp.eq.s32.totalorder %s25, 0
      %p129 = por %p127, %p128
      %p130 = scmp.ne.s32.totalorder %s119, %s122
      %p131 = scmp.eq.s32.totalorder %s30, 7
      %p132 = por %p130, %p131
      %p133 = scmp.ne.s32.totalorder %s122, %s123
      %p134 = scmp.eq.s32.totalorder %s30, 0
      %p135 = por %p133, %p134
      %p136 = scmp.ne.s32.totalorder %s122, %s123
      %p137 = scmp.eq.s32.totalorder %s31, 7
      %p138 = por %p136, %p137
      %p140 = scmp.ne.s32.totalorder %s123, %s139
      %p141 = scmp.eq.s32.totalorder %s31, 0
      %p142 = por %p140, %p141
      %s143 = ssub.s32 %s33, %s54
      %p144 = scmp.eq.s32.totalorder %s143, 0
      %s146 = sadd.s32 %s145, 1
      %s147 = scalar_select %p144, %s145, %s146
      %p150 = pneg %p144
      %p151 = scmp.eq.s32.totalorder %s25, 7
      %p152 = por %p150, %p151
      %p153 = scmp.ne.s32.totalorder %s145, %s148
      %p154 = scmp.eq.s32.totalorder %s25, 0
      %p155 = por %p153, %p154
      %p156 = scmp.ne.s32.totalorder %s145, %s148
      %p157 = scmp.eq.s32.totalorder %s30, 7
      %p158 = por %p156, %p157
      %p159 = scmp.ne.s32.totalorder %s148, %s149
      %p160 = scmp.eq.s32.totalorder %s30, 0
      %p161 = por %p159, %p160
      %p162 = scmp.ne.s32.totalorder %s148, %s149
      %p163 = scmp.eq.s32.totalorder %s31, 7
      %p164 = por %p162, %p163
      %p166 = scmp.ne.s32.totalorder %s149, %s165
      %p167 = scmp.eq.s32.totalorder %s31, 0
      %p168 = por %p166, %p167
      %s169 = ssub.s32 %s33, %s54
      %p170 = scmp.eq.s32.totalorder %s169, 0
      %s172 = sadd.s32 %s171, 1
      %s173 = scalar_select %p170, %s171, %s172
      %p176 = pneg %p170
      %p177 = scmp.eq.s32.totalorder %s25, 7
      %p178 = por %p176, %p177
      %p179 = scmp.ne.s32.totalorder %s171, %s174
      %p180 = scmp.eq.s32.totalorder %s25, 0
      %p181 = por %p179, %p180
      %p182 = scmp.ne.s32.totalorder %s171, %s174
      %p183 = scmp.eq.s32.totalorder %s30, 7
      %p184 = por %p182, %p183
      %p185 = scmp.ne.s32.totalorder %s174, %s175
      %p186 = scmp.eq.s32.totalorder %s30, 0
      %p187 = por %p185, %p186
      %p188 = scmp.ne.s32.totalorder %s174, %s175
      %p189 = scmp.eq.s32.totalorder %s31, 7
      %p190 = por %p188, %p189
      %p192 = scmp.ne.s32.totalorder %s175, %s191
      %p193 = scmp.eq.s32.totalorder %s31, 0
      %p194 = por %p192, %p193
      %s195 = ssub.s32 %s32, %s58
      %s196 = ssub.s32 %s33, %s54
      %s197 = sor.u32 %s195, %s196
      %p198 = scmp.eq.s32.totalorder %s197, 0
      %s200 = sadd.s32 %s199, 1
      %s201 = scalar_select %p198, %s199, %s200
      %p204 = pneg %p198
      %p205 = scmp.eq.s32.totalorder %s25, 7
      %p206 = por %p204, %p205
      %p207 = scmp.ne.s32.totalorder %s199, %s202
      %p208 = scmp.eq.s32.totalorder %s25, 0
      %p209 = por %p207, %p208
      %p210 = scmp.ne.s32.totalorder %s199, %s202
      %p211 = scmp.eq.s32.totalorder %s30, 7
      %p212 = por %p210, %p211
      %p213 = scmp.ne.s32.totalorder %s202, %s203
      %p214 = scmp.eq.s32.totalorder %s30, 0
      %p215 = por %p213, %p214
      %p216 = scmp.ne.s32.totalorder %s202, %s203
      %p217 = scmp.eq.s32.totalorder %s31, 7
      %p218 = por %p216, %p217
      %p220 = scmp.ne.s32.totalorder %s203, %s219
      %p221 = scmp.eq.s32.totalorder %s31, 0
      %p222 = por %p220, %p221
      %s223 = ssub.s32 %s32, %s58
      %s224 = ssub.s32 %s33, %s54
      %s225 = sor.u32 %s223, %s224
      %p226 = scmp.eq.s32.totalorder %s225, 0
      %s228 = sadd.s32 %s227, 1
      %s229 = scalar_select %p226, %s227, %s228
      %p232 = pneg %p226
      %p233 = scmp.eq.s32.totalorder %s25, 7
      %p234 = por %p232, %p233
      %p235 = scmp.ne.s32.totalorder %s227, %s230
      %p236 = scmp.eq.s32.totalorder %s25, 0
      %p237 = por %p235, %p236
      %p238 = scmp.ne.s32.totalorder %s227, %s230
      %p239 = scmp.eq.s32.totalorder %s30, 7
      %p240 = por %p238, %p239
      %p241 = scmp.ne.s32.totalorder %s230, %s231
      %p242 = scmp.eq.s32.totalorder %s30, 0
      %p243 = por %p241, %p242
      %p244 = scmp.ne.s32.totalorder %s230, %s231
      %p245 = scmp.eq.s32.totalorder %s31, 7
      %p246 = por %p244, %p245
      %p248 = scmp.ne.s32.totalorder %s231, %s247
      %p249 = scmp.eq.s32.totalorder %s31, 0
      %p250 = por %p248, %p249
      %s251 = ssub.s32 %s34, %s50
      %s252 = ssub.s32 %s32, %s58
      %s253 = sor.u32 %s251, %s252
      %s254 = ssub.s32 %s33, %s54
      %s255 = sor.u32 %s253, %s254
      %p256 = scmp.eq.s32.totalorder %s255, 0
      %s258 = sadd.s32 %s257, 1
      %s259 = scalar_select %p256, %s257, %s258
      %p262 = pneg %p256
      %p263 = scmp.eq.s32.totalorder %s25, 7
      %p264 = por %p262, %p263
      %p265 = scmp.ne.s32.totalorder %s257, %s260
      %p266 = scmp.eq.s32.totalorder %s25, 0
      %p267 = por %p265, %p266
      %p268 = scmp.ne.s32.totalorder %s257, %s260
      %p269 = scmp.eq.s32.totalorder %s30, 7
      %p270 = por %p268, %p269
      %p271 = scmp.ne.s32.totalorder %s260, %s261
      %p272 = scmp.eq.s32.totalorder %s30, 0
      %p273 = por %p271, %p272
      %p274 = scmp.ne.s32.totalorder %s260, %s261
      %p275 = scmp.eq.s32.totalorder %s31, 7
      %p276 = por %p274, %p275
      %p278 = scmp.ne.s32.totalorder %s261, %s277
      %p279 = scmp.eq.s32.totalorder %s31, 0
      %p280 = por %p278, %p279
      %s281 = ssub.s32 %s34, %s50
      %s282 = ssub.s32 %s32, %s58
      %s283 = sor.u32 %s281, %s282
      %s284 = ssub.s32 %s33, %s54
      %s285 = sor.u32 %s283, %s284
      %p286 = scmp.eq.s32.totalorder %s285, 0
      %s288 = sadd.s32 %s287, 1
      %s289 = scalar_select %p286, %s287, %s288
      %p292 = pneg %p286
      %p293 = scmp.eq.s32.totalorder %s25, 7
      %p294 = por %p292, %p293
      %p295 = scmp.ne.s32.totalorder %s287, %s290
      %p296 = scmp.eq.s32.totalorder %s25, 0
      %p297 = por %p295, %p296
      %p298 = scmp.ne.s32.totalorder %s287, %s290
      %p299 = scmp.eq.s32.totalorder %s30, 7
      %p300 = por %p298, %p299
      %p301 = scmp.ne.s32.totalorder %s290, %s291
      %p302 = scmp.eq.s32.totalorder %s30, 0
      %p303 = por %p301, %p302
      %p304 = scmp.ne.s32.totalorder %s290, %s291
      %p305 = scmp.eq.s32.totalorder %s31, 7
      %p306 = por %p304, %p305
      %p308 = scmp.ne.s32.totalorder %s291, %s307
      %p309 = scmp.eq.s32.totalorder %s31, 0
      %p310 = por %p308, %p309
      %p311 = scmp.le.s32.totalorder 1, %s25
      %p312 = scmp.lt.s32.totalorder %s25, 9
      %p313 = pnand %p311, %p312
      %p314 = pneg %p313
      // Predicated region
      $region9: #{tpu_custom_call.1} parent=5 // pred_check
        _
      $region10: #{tpu_custom_call.1} parent=5 // pred_check_branch
        %316 = sbr.rel (%p313) target = $region12
      $region11: #{tpu_custom_call.1} parent=5 // pred_region
        %s317 = ssub.s32 %s25, 1
        // Predicated region
        $region13: #{tpu_custom_call.1} parent=11 // pred_check
          %p318 = pneg %p109
        $region14: #{tpu_custom_call.1} parent=11 // pred_check_branch
          %320 = sbr.rel (%p318) target = $region16
        $region15: #{tpu_custom_call.1} parent=11 // pred_region
          %s321 = smul.u32 16, %s39
          %s323 = ssub.s32 1024, 1024
          %324 = vsyncadd [#allocation9], %s323
          %s325 = sadd.s32 %s37, %s321
          %s326 = smul.addr %s325, 64
          %s327 = scalar_lea.hbm %s1, %s326
          %s328 = sshll.u32 [#allocation8], 4
          %s329 = int_to_ptr.vmem [resolvable:$true] %s328
          %334 = dma.hbm_to_vmem [thread:$0]  %s327, 1024, %s329, [#allocation9], 64, 64, 4
        $region16: #{tpu_custom_call.1} parent=11 // pred_fallthru
          _
        // Predicated region
        $region17: #{tpu_custom_call.1} parent=11 // pred_check
          %p335 = pneg %p135
        $region18: #{tpu_custom_call.1} parent=11 // pred_check_branch
          %337 = sbr.rel (%p335) target = $region20
        $region19: #{tpu_custom_call.1} parent=11 // pred_region
          %p338 = scmp.lt.s32.totalorder %s37, 0
          %s339 = scalar_select %p338, %s37, 0
          %s340 = scalar_lea.vmem %s2, %s339
        $region20: #{tpu_custom_call.1} parent=11 // pred_fallthru
          _
        // Predicated region
        $region21: #{tpu_custom_call.1} parent=11 // pred_check
          %p341 = pneg %p161
        $region22: #{tpu_custom_call.1} parent=11 // pred_check_branch
          %343 = sbr.rel (%p341) target = $region24
        $region23: #{tpu_custom_call.1} parent=11 // pred_region
          %p344 = scmp.lt.s32.totalorder %s37, 0
          %s345 = scalar_select %p344, %s37, 0
          %s346 = scalar_lea.vmem %s3, %s345
        $region24: #{tpu_custom_call.1} parent=11 // pred_fallthru
          _
        // Predicated region
        $region25: #{tpu_custom_call.1} parent=11 // pred_check
          %p347 = pneg %p187
        $region26: #{tpu_custom_call.1} parent=11 // pred_check_branch
          %349 = sbr.rel (%p347) target = $region28
        $region27: #{tpu_custom_call.1} parent=11 // pred_region
          %s351 = ssub.s32 16, 16
          %352 = vsyncadd [#allocation9], %s351
          %s353 = smul.addr %s37, 16
          %s354 = scalar_lea.hbm %s4, %s353
          %s356 = sshll.u32 [#allocation10], 4
          %s357 = int_to_ptr.vmem [resolvable:$true] %s356
          %359 = dma.hbm_to_vmem [thread:$0]  %s354, 16, %s357, [#allocation9]
        $region28: #{tpu_custom_call.1} parent=11 // pred_fallthru
          _
        // Predicated region
        $region29: #{tpu_custom_call.1} parent=11 // pred_check
          %p360 = pneg %p215
        $region30: #{tpu_custom_call.1} parent=11 // pred_check_branch
          %362 = sbr.rel (%p360) target = $region32
        $region31: #{tpu_custom_call.1} parent=11 // pred_region
          %p363 = scmp.lt.s32.totalorder %s36, 0
          %s364 = scalar_select %p363, %s36, 0
          %p365 = scmp.lt.s32.totalorder %s37, 0
          %s366 = scalar_select %p365, %s37, 0
          %s367 = sadd.s32 %s366, %s364
          %s368 = smul.addr %s367, 8
          %s369 = scalar_lea.vmem %s5, %s368
        $region32: #{tpu_custom_call.1} parent=11 // pred_fallthru
          _
        // Predicated region
        $region33: #{tpu_custom_call.1} parent=11 // pred_check
          %p370 = pneg %p243
        $region34: #{tpu_custom_call.1} parent=11 // pred_check_branch
          %372 = sbr.rel (%p370) target = $region36
        $region35: #{tpu_custom_call.1} parent=11 // pred_region
          %p373 = scmp.lt.s32.totalorder %s36, 0
          %s374 = scalar_select %p373, %s36, 0
          %p375 = scmp.lt.s32.totalorder %s37, 0
          %s376 = scalar_select %p375, %s37, 0
          %s377 = sadd.s32 %s376, %s374
          %s378 = smul.addr %s377, 8
          %s379 = scalar_lea.vmem %s6, %s378
        $region36: #{tpu_custom_call.1} parent=11 // pred_fallthru
          _
      $region12: #{tpu_custom_call.1} parent=5 // pred_fallthru
        _
      %p380 = scmp.lt.s32.totalorder %s25, 8
      // Predicated region
      $region37: #{tpu_custom_call.1} parent=5 // pred_check
        %p381 = pneg %p380
      $region38: #{tpu_custom_call.1} parent=5 // pred_check_branch
        %383 = sbr.rel (%p381) target = $region40
      $region39: #{tpu_custom_call.1} parent=5 // pred_region
        // Predicated region
        $region41: #{tpu_custom_call.1} parent=39 // pred_check
          %p384 = pneg %p75
        $region42: #{tpu_custom_call.1} parent=39 // pred_check_branch
          %386 = sbr.rel (%p384) target = $region44
        $region43: #{tpu_custom_call.1} parent=39 // pred_region
          %s387 = sand.u32 %s65, 1
          %s388 = scalar_lea.sflag [#allocation6], %s387
          %s389 = sand.u32 %s65, 1
          %s390 = smul.addr %s389, 4
          %s391 = scalar_lea.vmem [#allocation5], %s390
          %s393 = ssub.s32 64, 64
          %394 = vsyncadd %s388, %s393
          %s395 = sadd.s32 %s35, %s32
          %s396 = sadd.s32 %s395, %s34
          %s397 = smul.addr %s396, 64
          %s398 = scalar_lea.hbm %s0, %s397
          %s400 = sshll.u32 %s391, 4
          %s401 = int_to_ptr.vmem [resolvable:$true] %s400
          %403 = dma.hbm_to_vmem [thread:$0]  %s398, 64, %s401, %s388
        $region44: #{tpu_custom_call.1} parent=39 // pred_fallthru
          _
      $region40: #{tpu_custom_call.1} parent=5 // pred_fallthru
        _
      %p404 = scmp.le.s32.totalorder 1, %s25
      %p405 = scmp.lt.s32.totalorder %s25, 9
      %p406 = pnand %p404, %p405
      %p407 = pneg %p406
      // Predicated region
      $region45: #{tpu_custom_call.1} parent=5 // pred_check
        _
      $region46: #{tpu_custom_call.1} parent=5 // pred_check_branch
        %409 = sbr.rel (%p406) target = $region48
      $region47: #{tpu_custom_call.1} parent=5 // pred_region
        %s410 = ssub.s32 %s25, 1
        %s411 = sand.u32 %s68, 1
        %s412 = scalar_lea.sflag [#allocation6], %s411
        %s413 = sand.u32 %s68, 1
        %s414 = smul.addr %s413, 4
        %s415 = scalar_lea.vmem [#allocation5], %s414
        // Predicated region
        $region49: #{tpu_custom_call.1} parent=47 // pred_check
          %p416 = pneg %p81
        $region50: #{tpu_custom_call.1} parent=47 // pred_check_branch
          %418 = sbr.rel (%p416) target = $region52
        $region51: #{tpu_custom_call.1} parent=47 // pred_region
          %419 = dma.done %s412, 64
        $region52: #{tpu_custom_call.1} parent=47 // pred_fallthru
          _
        // Predicated region
        $region53: #{tpu_custom_call.1} parent=47 // pred_check
          %p420 = pneg %p109
        $region54: #{tpu_custom_call.1} parent=47 // pred_check_branch
          %422 = sbr.rel (%p420) target = $region56
        $region55: #{tpu_custom_call.1} parent=47 // pred_region
          %423 = dma.done [#allocation9], 1024
        $region56: #{tpu_custom_call.1} parent=47 // pred_fallthru
          _
        // Predicated region
        $region57: #{tpu_custom_call.1} parent=47 // pred_check
          %p424 = pneg %p187
        $region58: #{tpu_custom_call.1} parent=47 // pred_check_branch
          %426 = sbr.rel (%p424) target = $region60
        $region59: #{tpu_custom_call.1} parent=47 // pred_region
          %427 = dma.done [#allocation9], 16
        $region60: #{tpu_custom_call.1} parent=47 // pred_fallthru
          _
        %s428 = sand.u32 %s68, 1
        %s429 = scalar_lea.sflag [#allocation6], %s428
        %s430 = sand.u32 %s68, 1
        %s431 = smul.addr %s430, 4
        %s432 = scalar_lea.vmem [#allocation5], %s431
        %p433 = pneg %p81
        %p434 = pneg %p78
        %p435 = pneg %p109
        %p436 = pneg %p106
        %p437 = scmp.lt.s32.totalorder %s37, 0
        %s438 = scalar_select %p437, %s37, 0
        %s439 = scalar_lea.vmem %s2, %s438
        %p440 = pneg %p135
        %p441 = pneg %p132
        %p442 = scmp.lt.s32.totalorder %s37, 0
        %s443 = scalar_select %p442, %s37, 0
        %s444 = scalar_lea.vmem %s3, %s443
        %p445 = pneg %p161
        %p446 = pneg %p158
        %p447 = pneg %p187
        %p448 = pneg %p184
        %p449 = scmp.lt.s32.totalorder %s36, 0
        %s450 = scalar_select %p449, %s36, 0
        %p451 = scmp.lt.s32.totalorder %s37, 0
        %s452 = scalar_select %p451, %s37, 0
        %s453 = sadd.s32 %s452, %s450
        %s454 = smul.addr %s453, 8
        %s455 = scalar_lea.vmem %s5, %s454
        %p456 = pneg %p215
        %p457 = pneg %p212
        %p458 = scmp.lt.s32.totalorder %s36, 0
        %s459 = scalar_select %p458, %s36, 0
        %p460 = scmp.lt.s32.totalorder %s37, 0
        %s461 = scalar_select %p460, %s37, 0
        %s462 = sadd.s32 %s461, %s459
        %s463 = smul.addr %s462, 8
        %s464 = scalar_lea.vmem %s6, %s463
        %p465 = pneg %p243
        %p466 = pneg %p240
        %p467 = pneg %p273
        %p468 = pneg %p270
        %s469 = sand.u32 %s260, 1
        %s470 = scalar_lea.sflag [#allocation7], %s469
        %s471 = sand.u32 %s260, 1
        %s472 = smul.addr %s471, 8
        %s473 = scalar_lea.vmem [#allocation11], %s472
        %p474 = pneg %p303
        %p475 = pneg %p300
        %s476 = sand.u32 %s290, 1
        %s477 = scalar_lea.sflag [#allocation13], %s476
        %s478 = sand.u32 %s290, 1
        %s479 = smul.addr %s478, 8
        %s480 = scalar_lea.vmem [#allocation12], %s479
        %s481 = smul.u32 16, %s39
        %p482 = scmp.lt.s32.totalorder %s37, 0
        %s483 = scalar_select %p482, %s37, 0
        %s484 = scalar_lea.vmem %s2, %s483
        %p485 = scmp.lt.s32.totalorder %s37, 0
        %s486 = scalar_select %p485, %s37, 0
        %s487 = scalar_lea.vmem %s3, %s486
        %p488 = scmp.lt.s32.totalorder %s36, 0
        %s489 = scalar_select %p488, %s36, 0
        %p490 = scmp.lt.s32.totalorder %s37, 0
        %s491 = scalar_select %p490, %s37, 0
        %s492 = sadd.s32 %s491, %s489
        %s493 = smul.addr %s492, 8
        %s494 = scalar_lea.vmem %s5, %s493
        %p495 = scmp.lt.s32.totalorder %s36, 0
        %s496 = scalar_select %p495, %s36, 0
        %p497 = scmp.lt.s32.totalorder %s37, 0
        %s498 = scalar_select %p497, %s37, 0
        %s499 = sadd.s32 %s498, %s496
        %s500 = smul.addr %s499, 8
        %s501 = scalar_lea.vmem %s6, %s500
        %p503 = scmp.eq.s32.totalorder %s38, 0
        %p504 = scmp.eq.s32.totalorder %s39, 0
        %p505 = pnand %p503, %p504
        %p506 = pneg %p505
        // Predicated region
        $region61: #{tpu_custom_call.1} parent=47 // pred_check
          _
        $region62: #{tpu_custom_call.1} parent=47 // pred_check_branch
          %508 = sbr.rel (%p505) target = $region64
        $region63: #{tpu_custom_call.1} parent=47 // pred_region
          %v509 = vld [vmem:[%s494] sm:$0xff]
          %510 = vst [vmem:[#allocation3] sm:$0xff] %v509
          %v511 = vld [vmem:[%s501] sm:$0xff]
          %512 = vst [vmem:[#allocation4] sm:$0xff] %v511
        $region64: #{tpu_custom_call.1} parent=47 // pred_fallthru
          _
        // Predicated region
        $region65: #{tpu_custom_call.1} parent=47 // pred_check
          %p513 = pneg %p504
        $region66: #{tpu_custom_call.1} parent=47 // pred_check_branch
          %515 = sbr.rel (%p513) target = $region68
        $region67: #{tpu_custom_call.1} parent=47 // pred_region
          %516 = vst [vmem:[#allocation2] sm:$0xff] 0.0
        $region68: #{tpu_custom_call.1} parent=47 // pred_fallthru
          _
        %v517 = vld [vmem:[#allocation2] sm:$0xff]
        %v518 = vld [vmem:[%s415] sm:$0xf]
        %v519 = vld [vmem:[#allocation8] sm:$0xf]
        %v520 = vld [vmem:[#allocation8 + $0x4] sm:$0xf]
        %v521 = vld [vmem:[#allocation8 + $0x8] sm:$0xf]
        %v522 = vld [vmem:[#allocation8 + $0xc] sm:$0xf]
        %v523 = vld [vmem:[#allocation8 + $0x10] sm:$0xf]
        %v524 = vld [vmem:[#allocation8 + $0x14] sm:$0xf]
        %v525 = vld [vmem:[#allocation8 + $0x18] sm:$0xf]
        %v526 = vld [vmem:[#allocation8 + $0x1c] sm:$0xf]
        %v527 = vld [vmem:[#allocation8 + $0x20] sm:$0xf]
        %v528 = vld [vmem:[#allocation8 + $0x24] sm:$0xf]
        %v529 = vld [vmem:[#allocation8 + $0x28] sm:$0xf]
        %v530 = vld [vmem:[#allocation8 + $0x2c] sm:$0xf]
        %v531 = vld [vmem:[#allocation8 + $0x30] sm:$0xf]
        %v532 = vld [vmem:[#allocation8 + $0x34] sm:$0xf]
        %v533 = vld [vmem:[#allocation8 + $0x38] sm:$0xf]
        %v534 = vld [vmem:[#allocation8 + $0x3c] sm:$0xf]
        %v551 = vunpack.c.l.b16 %v519
        %v552 = vunpack.c.l.b16 %v520
        %v553 = vunpack.c.l.b16 %v521
        %v554 = vunpack.c.l.b16 %v522
        %v555 = vunpack.c.l.b16 %v523
        %v556 = vunpack.c.l.b16 %v524
        %v557 = vunpack.c.l.b16 %v525
        %v558 = vunpack.c.l.b16 %v526
        %v559 = vunpack.c.l.b16 %v527
        %v560 = vunpack.c.l.b16 %v528
        %v561 = vunpack.c.l.b16 %v529
        %v562 = vunpack.c.l.b16 %v530
        %v563 = vunpack.c.l.b16 %v531
        %v564 = vunpack.c.l.b16 %v532
        %v565 = vunpack.c.l.b16 %v533
        %v566 = vunpack.c.l.b16 %v534
        %v567 = vpack.c.b16 %v552, %v551
        %v568 = vpack.c.b16 %v554, %v553
        %v569 = vpack.c.b16 %v556, %v555
        %v570 = vpack.c.b16 %v558, %v557
        %v571 = vpack.c.b16 %v560, %v559
        %v572 = vpack.c.b16 %v562, %v561
        %v573 = vpack.c.b16 %v564, %v563
        %v574 = vpack.c.b16 %v566, %v565
        %583 = vmatprep.subr.bf16.mxu0 0
        %584 = vmatpush1.bf16.msra.mxu0 %v567
        %585 = vmatprep.subr.bf16.mxu0 0
        %586 = vmatpush1.bf16.msra.mxu0 %v568
        %587 = vmatprep.subr.bf16.mxu0 0
        %588 = vmatpush1.bf16.msra.mxu0 %v569
        %589 = vmatprep.subr.bf16.mxu0 0
        %590 = vmatpush1.bf16.msra.mxu0 %v570
        %591 = vmatprep.subr.bf16.mxu0 0
        %592 = vmatpush1.bf16.msra.mxu0 %v571
        %593 = vmatprep.subr.bf16.mxu0 0
        %594 = vmatpush1.bf16.msra.mxu0 %v572
        %595 = vmatprep.subr.bf16.mxu0 0
        %596 = vmatpush1.bf16.msra.mxu0 %v573
        %597 = vmatprep.subr.bf16.mxu0 0
        %598 = vmatpush1.bf16.msra.mxu0 %v574
        %599 = vmatprep.subr.bf16.mxu0 0
        %600 = vmatpush1.bf16.msra.mxu0 0
        %601 = vmatprep.subr.bf16.mxu0 0
        %602 = vmatpush1.bf16.msra.mxu0 0
        %603 = vmatprep.subr.bf16.mxu0 0
        %604 = vmatpush1.bf16.msra.mxu0 0
        %605 = vmatprep.subr.bf16.mxu0 0
        %606 = vmatpush1.bf16.msra.mxu0 0
        %607 = vmatprep.subr.bf16.mxu0 0
        %608 = vmatpush1.bf16.msra.mxu0 0
        %609 = vmatprep.subr.bf16.mxu0 0
        %610 = vmatpush1.bf16.msra.mxu0 0
        %611 = vmatprep.subr.bf16.mxu0 0
        %612 = vmatpush1.bf16.msra.mxu0 0
        %613 = vmatprep.subr.bf16.mxu0 0
        %614 = vmatpush1.bf16.msra.mxu0 0
        %615 = vmatprep.mubr.bf16.mxu0 0
        %616 = vmatmul.mubr.bf16.gmra.mrb[0].mxu0 %v518
        %v617 = vpop.f32.mrb[0].mxu0
        %v618 = vadd.f32 0.0, %v617
        %v619 = vpop.f32.mrb[0].mxu0
        %v620 = vpop.f32.mrb[0].mxu0
        %v621 = vpop.f32.mrb[0].mxu0
        %622 = vdwg.mxu0
        %v623 = vadd.f32 %v517, %v618
        %624 = vst [vmem:[#allocation2] sm:$0xff] %v623
        // Predicated region
        $region69: #{tpu_custom_call.1} parent=47 // pred_check
          %p625 = pneg %p504
        $region70: #{tpu_custom_call.1} parent=47 // pred_check_branch
          %627 = sbr.rel (%p625) target = $region72
        $region71: #{tpu_custom_call.1} parent=47 // pred_region
          %v628 = vld [vmem:[#allocation2] sm:$0xff]
          %v629 = vld [vmem:[%s484] sm:$0x1]
          %v631 = vlaneseq
          %v632 = vshrl.u32 %v631, 7
          %v633 = vsub.s32 0, %v632
          %v634 = vrot.slane %v629, %v633
          %v636 = vadd.f32 %v628, %v634
          %v637 = vld [vmem:[%s487] sm:$0x1]
          %v638 = vld [vmem:[#allocation3] sm:$0xff]
          %v640 = vlaneseq
          %v641 = vshrl.u32 %v640, 7
          %v642 = vsub.s32 0, %v641
          %v643 = vrot.slane %v637, %v642
          %v645 = vmul.f32 %v638, %v643
          %v646 = vld [vmem:[#allocation4] sm:$0xff]
          %v647 = vsub.f32 1.0, %v646
          %v648 = vmul.f32 %v645, %v647
          %v649 = vsub.f32 1.0, %v637
          %v651 = vlaneseq
          %v652 = vshrl.u32 %v651, 7
          %v653 = vsub.s32 0, %v652
          %v654 = vrot.slane %v649, %v653
          %v656 = vmul.f32 %v654, %v636
          %v657 = vadd.f32 %v648, %v656
          %v658 = vld [vmem:[#allocation10] sm:$0x1]
          %v660 = vlaneseq
          %v661 = vshrl.u32 %v660, 7
          %v662 = vsub.s32 0, %v661
          %v663 = vrot.slane %v658, %v662
          %v665 = vsub.f32 %v657, %v663
          %vm666 = vcmp.gt.f32.partialorder %v665, 0.0
          %v667 = vsel %vm666, 1, 0
          %v668 = vcvt.s32.f32 %v667
          %669 = vst [vmem:[#allocation3] sm:$0xff] %v657
          %670 = vst [vmem:[#allocation4] sm:$0xff] %v668
          %671 = vst [vmem:[%s473] sm:$0xff] %v657
          %672 = vst [vmem:[%s480] sm:$0xff] %v668
        $region72: #{tpu_custom_call.1} parent=47 // pred_fallthru
          _
        %s673 = sand.u32 %s260, 1
        %s674 = scalar_lea.sflag [#allocation7], %s673
        %s675 = sand.u32 %s260, 1
        %s676 = smul.addr %s675, 8
        %s677 = scalar_lea.vmem [#allocation11], %s676
        %s678 = sand.u32 %s290, 1
        %s679 = scalar_lea.sflag [#allocation13], %s678
        %s680 = sand.u32 %s290, 1
        %s681 = smul.addr %s680, 8
        %s682 = scalar_lea.vmem [#allocation12], %s681
        // Predicated region
        $region73: #{tpu_custom_call.1} parent=47 // pred_check
          %p683 = pneg %p270
        $region74: #{tpu_custom_call.1} parent=47 // pred_check_branch
          %685 = sbr.rel (%p683) target = $region76
        $region75: #{tpu_custom_call.1} parent=47 // pred_region
          %s687 = ssub.s32 128, 128
          %688 = vsyncadd %s674, %s687
          %s689 = sadd.s32 %s37, %s36
          %s690 = sadd.s32 %s689, %s38
          %s691 = smul.addr %s690, 128
          %s692 = scalar_lea.hbm %s7, %s691
          %s694 = sshll.u32 %s677, 4
          %s695 = int_to_ptr.vmem [resolvable:$true] %s694
          %697 = dma.vmem_to_hbm [thread:$0]  %s695, 128, %s692, %s674
        $region76: #{tpu_custom_call.1} parent=47 // pred_fallthru
          _
        // Predicated region
        $region77: #{tpu_custom_call.1} parent=47 // pred_check
          %p698 = pneg %p300
        $region78: #{tpu_custom_call.1} parent=47 // pred_check_branch
          %700 = sbr.rel (%p698) target = $region80
        $region79: #{tpu_custom_call.1} parent=47 // pred_region
          %s702 = ssub.s32 128, 128
          %703 = vsyncadd %s679, %s702
          %s704 = sadd.s32 %s37, %s36
          %s705 = sadd.s32 %s704, %s38
          %s706 = smul.addr %s705, 128
          %s707 = scalar_lea.hbm %s8, %s706
          %s709 = sshll.u32 %s682, 4
          %s710 = int_to_ptr.vmem [resolvable:$true] %s709
          %712 = dma.vmem_to_hbm [thread:$0]  %s710, 128, %s707, %s679
        $region80: #{tpu_custom_call.1} parent=47 // pred_fallthru
          _
      $region48: #{tpu_custom_call.1} parent=5 // pred_fallthru
        _
      %p713 = scmp.le.s32.totalorder 2, %s25
      // Predicated region
      $region81: #{tpu_custom_call.1} parent=5 // pred_check
        %p714 = pneg %p713
      $region82: #{tpu_custom_call.1} parent=5 // pred_check_branch
        %716 = sbr.rel (%p714) target = $region84
      $region83: #{tpu_custom_call.1} parent=5 // pred_region
        %s717 = ssub.s32 %s25, 2
        // Predicated region
        $region85: #{tpu_custom_call.1} parent=83 // pred_check
          %p718 = pneg %p276
        $region86: #{tpu_custom_call.1} parent=83 // pred_check_branch
          %720 = sbr.rel (%p718) target = $region88
        $region87: #{tpu_custom_call.1} parent=83 // pred_region
          %s721 = sand.u32 %s261, 1
          %s722 = scalar_lea.sflag [#allocation7], %s721
          %s723 = sand.u32 %s261, 1
          %s724 = smul.addr %s723, 8
          %s725 = scalar_lea.vmem [#allocation11], %s724
          %726 = dma.done %s722, 128
        $region88: #{tpu_custom_call.1} parent=83 // pred_fallthru
          _
        // Predicated region
        $region89: #{tpu_custom_call.1} parent=83 // pred_check
          %p727 = pneg %p306
        $region90: #{tpu_custom_call.1} parent=83 // pred_check_branch
          %729 = sbr.rel (%p727) target = $region92
        $region91: #{tpu_custom_call.1} parent=83 // pred_region
          %s730 = sand.u32 %s291, 1
          %s731 = scalar_lea.sflag [#allocation13], %s730
          %s732 = sand.u32 %s291, 1
          %s733 = smul.addr %s732, 8
          %s734 = scalar_lea.vmem [#allocation12], %s733
          %735 = dma.done %s731, 128
        $region92: #{tpu_custom_call.1} parent=83 // pred_fallthru
          _
      $region84: #{tpu_custom_call.1} parent=5 // pred_fallthru
        _
    $region6: #{tpu_custom_call.1} parent=1 // loop_footer
      %s29 = sadd.s32 1, %s25
    $region7: #{tpu_custom_call.1} parent=1 // loop_footer_branch
      %24 = sbr.rel target = $region3
    $region8: #{tpu_custom_call.1} parent=1 // loop_exit
      _
    %736 = vsyncpa [#allocation6], 1
    %s737 = scalar_lea.sflag [#allocation6], 1
    %738 = vsyncpa %s737, 1
    %739 = vsyncpa [#allocation9], 1
    %740 = vsyncpa [#allocation7], 1
    %s741 = scalar_lea.sflag [#allocation7], 1
    %742 = vsyncpa %s741, 1
    %743 = vsyncpa [#allocation13], 1
    %s744 = scalar_lea.sflag [#allocation13], 1
    %745 = vsyncpa %s744, 1

</llo_original>
